<compile_context>
chip_gen: v7x
topology: tpu7x:2x2x1
jax: 0.10.0
libtpu: 0.0.40
codegen_flags: <defaults>
</compile_context>

<pallas_src>
import functools

import jax
import jax.numpy as jnp
from jax import lax
from jax.experimental import pallas as pl
from jax.experimental.pallas import tpu as pltpu


def _clip_loss_kernel(f1_ref, f2_ref, out_ref,
                      m_r_ref, l_r_ref, m_c_ref, l_c_ref, acc_ref,
                      *, n_total: int, l2_normalize: bool):
    i = pl.program_id(0)                 # row block
    j = pl.program_id(1)                 # col block (innermost grid axis)
    n_row_blocks = pl.num_programs(0)
    n_col_blocks = pl.num_programs(1)

    f1 = f1_ref[...]                     # (T, D), input dtype
    f2 = f2_ref[...]                     # (T, D), input dtype

    if l2_normalize:
        # F.normalize(x, p=2, dim=-1): x / max(||x||, eps) with eps = 1e-12,
        # implemented as x * min(rsqrt(sum x^2), 1/eps)  (one EUP rsqrt per row).
        eps_inv = 1e12
        f1f = f1.astype(jnp.float32)
        f2f = f2.astype(jnp.float32)
        inv1 = jnp.minimum(lax.rsqrt(jnp.sum(f1f * f1f, axis=-1, keepdims=True)), eps_inv)
        inv2 = jnp.minimum(lax.rsqrt(jnp.sum(f2f * f2f, axis=-1, keepdims=True)), eps_inv)
        f1 = (f1f * inv1).astype(f1.dtype)
        f2 = (f2f * inv2).astype(f2.dtype)

    # Logits tile: contract the feature dim of both operands (no explicit
    # transpose of f2), f32 MXU accumulation.
    s = lax.dot_general(f1, f2, (((1,), (1,)), ((), ())),
                        preferred_element_type=jnp.float32)   # (T, T) f32
    tm, tn = s.shape

    # ---- global init at the first grid step -------------------------------
    @pl.when((i == 0) & (j == 0))
    def _():
        acc_ref[...] = jnp.zeros_like(acc_ref)
        m_c_ref[...] = jnp.full_like(m_c_ref, -jnp.inf)
        l_c_ref[...] = jnp.zeros_like(l_c_ref)

    # ---- row-direction online softmax (reset at start of each row sweep) --
    @pl.when(j == 0)
    def _():
        m_r_ref[...] = jnp.full_like(m_r_ref, -jnp.inf)
        l_r_ref[...] = jnp.zeros_like(l_r_ref)

    m_r_old = m_r_ref[...]                                        # (T, 1)
    m_r_new = jnp.maximum(m_r_old, jnp.max(s, axis=1, keepdims=True))
    l_r_ref[...] = (l_r_ref[...] * jnp.exp(m_r_old - m_r_new)
                    + jnp.sum(jnp.exp(s - m_r_new), axis=1, keepdims=True))
    m_r_ref[...] = m_r_new

    # ---- column-direction online softmax (resident across row blocks) -----
    m_c_old = m_c_ref[j]                                          # (1, T)
    m_c_new = jnp.maximum(m_c_old, jnp.max(s, axis=0, keepdims=True))
    l_c_ref[j] = (l_c_ref[j] * jnp.exp(m_c_old - m_c_new)
                  + jnp.sum(jnp.exp(s - m_c_new), axis=0, keepdims=True))
    m_c_ref[j] = m_c_new

    # ---- diagonal (shared by both CE terms), only on diagonal tiles --------
    @pl.when(i == j)
    def _():
        rows = lax.broadcasted_iota(jnp.int32, (tm, tn), 0)
        cols = lax.broadcasted_iota(jnp.int32, (tm, tn), 1)
        dsum = jnp.sum(jnp.where(rows == cols, s, 0.0))
        acc_ref[...] = acc_ref[...] - 2.0 * dsum

    # ---- finalize row LSEs for this row block ------------------------------
    @pl.when(j == n_col_blocks - 1)
    def _():
        lse_r = m_r_ref[...] + jnp.log(l_r_ref[...])              # (T, 1)
        acc_ref[...] = acc_ref[...] + jnp.sum(lse_r)

    # ---- epilogue: column LSEs + scalar loss, written once -----------------
    @pl.when((i == n_row_blocks - 1) & (j == n_col_blocks - 1))
    def _():
        lse_c = m_c_ref[...] + jnp.log(l_c_ref[...])              # (C, 1, T)
        total = acc_ref[...] + jnp.sum(lse_c)
        out_ref[...] = total * (1.0 / (2.0 * n_total))


def _pick_block(n: int) -> int:
    # Prefer 256-multiples (v6e/v7x MXU is 2x256^2); 128 is still fine on v5e.
    for t in (256, 128, 64, 32, 16, 8):
        if n % t == 0:
            return t
    return n  # single full-size block (allowed: block dim == full array dim)


def clip_loss(features_1: jax.Array, features_2: jax.Array,
              l2_normalize: bool = False, block_size: int | None = None) -> jax.Array:
    """CLIPLoss.forward for world_size == 1.  Returns a scalar f32 loss."""
    assert features_1.shape == features_2.shape and features_1.ndim == 2
    n, d = features_1.shape
    t = block_size if block_size is not None else _pick_block(n)
    assert n % t == 0, "batch size must be divisible by the block size"
    r = n // t
    c = n // t

    kernel = functools.partial(_clip_loss_kernel, n_total=n,
                               l2_normalize=l2_normalize)
    out = pl.pallas_call(
        kernel,
        out_shape=jax.ShapeDtypeStruct((1, 1), jnp.float32),
        grid_spec=pltpu.PrefetchScalarGridSpec(
            num_scalar_prefetch=0,
            grid=(r, c),
            in_specs=[
                pl.BlockSpec((t, d), lambda i, j: (i, 0)),   # f1 row block
                pl.BlockSpec((t, d), lambda i, j: (j, 0)),   # f2 col block
            ],
            out_specs=pl.BlockSpec((1, 1), lambda i, j: (0, 0)),
            scratch_shapes=[
                pltpu.VMEM((t, 1), jnp.float32),      # running row max
                pltpu.VMEM((t, 1), jnp.float32),      # running row sum-exp
                pltpu.VMEM((c, 1, t), jnp.float32),   # running col max (all col blocks)
                pltpu.VMEM((c, 1, t), jnp.float32),   # running col sum-exp
                pltpu.VMEM((1, 1), jnp.float32),      # scalar accumulator
            ],
        ),
        compiler_params=pltpu.CompilerParams(
            # Scalar output + resident column stats accumulate across BOTH grid
            # axes, so both must be sequential ("arbitrary").
            dimension_semantics=("arbitrary", "arbitrary"),
            # Conservative budget that also fits v7x's 64 MiB physical VMEM.
            vmem_limit_bytes=48 << 20,
        ),
    )(features_1, features_2)
    return out[0, 0]


def _reference_clip_loss(f1, f2, l2_normalize=False):
    """Plain-JAX reference mirroring the PyTorch module (world_size == 1)."""
    f1 = f1.astype(jnp.float32)
    f2 = f2.astype(jnp.float32)
    if l2_normalize:
        f1 = f1 / jnp.maximum(jnp.linalg.norm(f1, axis=-1, keepdims=True), 1e-12)
        f2 = f2 / jnp.maximum(jnp.linalg.norm(f2, axis=-1, keepdims=True), 1e-12)
    logits1 = f1 @ f2.T
    logits2 = f2 @ f1.T
    n = logits1.shape[0]
    labels = jnp.arange(n)

    def ce(logits):
        logp = jax.nn.log_softmax(logits, axis=-1)
        return -jnp.mean(logp[jnp.arange(n), labels])

    return (ce(logits1) + ce(logits2)) / 2.0


if __name__ == "__main__":
    key = jax.random.PRNGKey(0)
    k1, k2 = jax.random.split(key)

    # Small demo shapes: batch N=64, hidden D=32.  block_size=16 forces a 4x4
    # tiled grid so the online-softmax / resident-scratch path is exercised.
    N, D = 64, 32
    features_1 = jax.random.normal(k1, (N, D), dtype=jnp.float32)
    features_2 = jax.random.normal(k2, (N, D), dtype=jnp.float32)

    # Default module config: l2_normalize=False, world_size=1 (tiled grid).
    loss = clip_loss(features_1, features_2, l2_normalize=False, block_size=16)
    jax.block_until_ready(loss)
    ref = _reference_clip_loss(features_1, features_2, l2_normalize=False)
    assert jnp.allclose(loss, ref, rtol=1e-4, atol=1e-4), (loss, ref)

    # l2_normalize=True path, default (auto) tiling.
    loss_n = clip_loss(features_1, features_2, l2_normalize=True)
    jax.block_until_ready(loss_n)
    ref_n = _reference_clip_loss(features_1, features_2, l2_normalize=True)
    assert jnp.allclose(loss_n, ref_n, rtol=1e-4, atol=1e-4), (loss_n, ref_n)

    print("KERNEL_OK")
</pallas_src>

<mosaic_0001>
module attributes {stable_mosaic.version = 11 : i64} {
  func.func @_clip_loss_kernel(%arg0: i32, %arg1: i32, %arg2: memref<16x32xf32, #tpu.memory_space<vmem>>, %arg3: memref<16x32xf32, #tpu.memory_space<vmem>>, %arg4: memref<1x1xf32, #tpu.memory_space<vmem>>, %arg5: memref<16x1xf32, #tpu.memory_space<vmem>>, %arg6: memref<16x1xf32, #tpu.memory_space<vmem>>, %arg7: memref<4x1x16xf32, #tpu.memory_space<vmem>>, %arg8: memref<4x1x16xf32, #tpu.memory_space<vmem>>, %arg9: memref<1x1xf32, #tpu.memory_space<vmem>>) attributes {dimension_semantics = [#tpu.dimension_semantics<arbitrary>, #tpu.dimension_semantics<arbitrary>], iteration_bounds = array<i64: 4, 4>, scalar_prefetch = 0 : i64, scratch_operands = 5 : i64, tpu.core_type = #tpu.core_type<tc>, window_params = [{transform_indices = @transform_0, window_bounds = array<i64: 16, 32>}, {transform_indices = @transform_1, window_bounds = array<i64: 16, 32>}, {pipeline_mode = #tpu.pipeline_mode<synchronous>, transform_indices = @transform_2, window_bounds = array<i64: 1, 1>}]} {
    %c0 = arith.constant 0 : index
    %c0_0 = arith.constant 0 : index
    %0 = vector.load %arg2[%c0, %c0_0] : memref<16x32xf32, #tpu.memory_space<vmem>>, vector<16x32xf32>
    %c0_1 = arith.constant 0 : index
    %c0_2 = arith.constant 0 : index
    %1 = vector.load %arg3[%c0_1, %c0_2] : memref<16x32xf32, #tpu.memory_space<vmem>>, vector<16x32xf32>
    %cst = arith.constant dense<0.000000e+00> : vector<16x16xf32>
    %2 = tpu.matmul %0, %1, %cst {dimension_numbers = #tpu.dot_dimension_numbers<[1], [1], [0], [0], [0, 0, 1, 0], [], []>} : vector<16x32xf32>, vector<16x32xf32>, vector<16x16xf32> -> vector<16x16xf32>
    %c0_i32 = arith.constant 0 : i32
    %3 = arith.cmpi eq, %arg0, %c0_i32 : i32
    %c0_i32_3 = arith.constant 0 : i32
    %4 = arith.cmpi eq, %arg1, %c0_i32_3 : i32
    %5 = arith.andi %3, %4 : i1
    %6 = arith.extui %5 : i1 to i32
    %c0_i32_4 = arith.constant 0 : i32
    %7 = arith.cmpi ne, %6, %c0_i32_4 : i32
    scf.if %7 {
      %cst_32 = arith.constant 0.000000e+00 : f32
      %64 = vector.broadcast %cst_32 : f32 to vector<1x1xf32>
      %c0_33 = arith.constant 0 : index
      %c0_34 = arith.constant 0 : index
      %65 = vector.load %arg9[%c0_33, %c0_34] : memref<1x1xf32, #tpu.memory_space<vmem>>, vector<1x1xf32>
      tpu.vector_store %arg9[%c0_33, %c0_34], %64 {strides = array<i32>} : memref<1x1xf32, #tpu.memory_space<vmem>>, vector<1x1xf32>,
      %cst_35 = arith.constant 0xFF800000 : f32
      %66 = vector.broadcast %cst_35 : f32 to vector<4x1x16xf32>
      %c0_36 = arith.constant 0 : index
      %c0_37 = arith.constant 0 : index
      %c0_38 = arith.constant 0 : index
      %67 = vector.load %arg7[%c0_36, %c0_37, %c0_38] : memref<4x1x16xf32, #tpu.memory_space<vmem>>, vector<4x1x16xf32>
      tpu.vector_store %arg7[%c0_36, %c0_37, %c0_38], %66 {strides = array<i32>} : memref<4x1x16xf32, #tpu.memory_space<vmem>>, vector<4x1x16xf32>,
      %cst_39 = arith.constant 0.000000e+00 : f32
      %68 = vector.broadcast %cst_39 : f32 to vector<4x1x16xf32>
      %c0_40 = arith.constant 0 : index
      %c0_41 = arith.constant 0 : index
      %c0_42 = arith.constant 0 : index
      %69 = vector.load %arg8[%c0_40, %c0_41, %c0_42] : memref<4x1x16xf32, #tpu.memory_space<vmem>>, vector<4x1x16xf32>
      tpu.vector_store %arg8[%c0_40, %c0_41, %c0_42], %68 {strides = array<i32>} : memref<4x1x16xf32, #tpu.memory_space<vmem>>, vector<4x1x16xf32>,
    } else {
    }
    %c0_i32_5 = arith.constant 0 : i32
    %8 = arith.cmpi eq, %arg1, %c0_i32_5 : i32
    %9 = arith.extui %8 : i1 to i32
    %c0_i32_6 = arith.constant 0 : i32
    %10 = arith.cmpi ne, %9, %c0_i32_6 : i32
    scf.if %10 {
      %cst_32 = arith.constant 0xFF800000 : f32
      %64 = vector.broadcast %cst_32 : f32 to vector<16x1xf32>
      %c0_33 = arith.constant 0 : index
      %c0_34 = arith.constant 0 : index
      %65 = vector.load %arg5[%c0_33, %c0_34] : memref<16x1xf32, #tpu.memory_space<vmem>>, vector<16x1xf32>
      tpu.vector_store %arg5[%c0_33, %c0_34], %64 {strides = array<i32>} : memref<16x1xf32, #tpu.memory_space<vmem>>, vector<16x1xf32>,
      %cst_35 = arith.constant 0.000000e+00 : f32
      %66 = vector.broadcast %cst_35 : f32 to vector<16x1xf32>
      %c0_36 = arith.constant 0 : index
      %c0_37 = arith.constant 0 : index
      %67 = vector.load %arg6[%c0_36, %c0_37] : memref<16x1xf32, #tpu.memory_space<vmem>>, vector<16x1xf32>
      tpu.vector_store %arg6[%c0_36, %c0_37], %66 {strides = array<i32>} : memref<16x1xf32, #tpu.memory_space<vmem>>, vector<16x1xf32>,
    } else {
    }
    %c0_7 = arith.constant 0 : index
    %c0_8 = arith.constant 0 : index
    %11 = vector.load %arg5[%c0_7, %c0_8] : memref<16x1xf32, #tpu.memory_space<vmem>>, vector<16x1xf32>
    %cst_9 = arith.constant dense<0xFF800000> : vector<16xf32>
    %12 = vector.multi_reduction <maximumf>, %2, %cst_9 [1] : vector<16x16xf32> to vector<16xf32>
    %13 = vector.shape_cast %12 : vector<16xf32> to vector<16x1xf32>
    %14 = arith.maximumf %11, %13 : vector<16x1xf32>
    %c0_10 = arith.constant 0 : index
    %c0_11 = arith.constant 0 : index
    %15 = vector.load %arg6[%c0_10, %c0_11] : memref<16x1xf32, #tpu.memory_space<vmem>>, vector<16x1xf32>
    %16 = arith.subf %11, %14 : vector<16x1xf32>
    %17 = math.exp %16 : vector<16x1xf32>
    %18 = arith.mulf %15, %17 : vector<16x1xf32>
    %19 = vector.broadcast %14 : vector<16x1xf32> to vector<16x16xf32>
    %20 = arith.subf %2, %19 : vector<16x16xf32>
    %21 = math.exp %20 : vector<16x16xf32>
    %cst_12 = arith.constant dense<0.000000e+00> : vector<16xf32>
    %22 = vector.multi_reduction <add>, %21, %cst_12 [1] : vector<16x16xf32> to vector<16xf32>
    %23 = vector.shape_cast %22 : vector<16xf32> to vector<16x1xf32>
    %24 = arith.addf %18, %23 : vector<16x1xf32>
    %c0_13 = arith.constant 0 : index
    %c0_14 = arith.constant 0 : index
    %25 = vector.load %arg6[%c0_13, %c0_14] : memref<16x1xf32, #tpu.memory_space<vmem>>, vector<16x1xf32>
    tpu.vector_store %arg6[%c0_13, %c0_14], %24 {strides = array<i32>} : memref<16x1xf32, #tpu.memory_space<vmem>>, vector<16x1xf32>,
    %c0_15 = arith.constant 0 : index
    %c0_16 = arith.constant 0 : index
    %26 = vector.load %arg5[%c0_15, %c0_16] : memref<16x1xf32, #tpu.memory_space<vmem>>, vector<16x1xf32>
    tpu.vector_store %arg5[%c0_15, %c0_16], %14 {strides = array<i32>} : memref<16x1xf32, #tpu.memory_space<vmem>>, vector<16x1xf32>,
    %27 = arith.index_cast %arg1 : i32 to index
    %c0_17 = arith.constant 0 : index
    %c0_18 = arith.constant 0 : index
    %28 = vector.load %arg7[%27, %c0_17, %c0_18] : memref<4x1x16xf32, #tpu.memory_space<vmem>>, vector<1x1x16xf32>
    %29 = vector.shape_cast %28 : vector<1x1x16xf32> to vector<1x16xf32>
    %cst_19 = arith.constant dense<0xFF800000> : vector<16xf32>
    %30 = vector.multi_reduction <maximumf>, %2, %cst_19 [0] : vector<16x16xf32> to vector<16xf32>
    %31 = vector.shape_cast %30 : vector<16xf32> to vector<1x16xf32>
    %32 = arith.maximumf %29, %31 : vector<1x16xf32>
    %33 = arith.index_cast %arg1 : i32 to index
    %c0_20 = arith.constant 0 : index
    %c0_21 = arith.constant 0 : index
    %34 = vector.load %arg8[%33, %c0_20, %c0_21] : memref<4x1x16xf32, #tpu.memory_space<vmem>>, vector<1x1x16xf32>
    %35 = vector.shape_cast %34 : vector<1x1x16xf32> to vector<1x16xf32>
    %36 = arith.subf %29, %32 : vector<1x16xf32>
    %37 = math.exp %36 : vector<1x16xf32>
    %38 = arith.mulf %35, %37 : vector<1x16xf32>
    %39 = vector.broadcast %32 : vector<1x16xf32> to vector<16x16xf32>
    %40 = arith.subf %2, %39 : vector<16x16xf32>
    %41 = math.exp %40 : vector<16x16xf32>
    %cst_22 = arith.constant dense<0.000000e+00> : vector<16xf32>
    %42 = vector.multi_reduction <add>, %41, %cst_22 [0] : vector<16x16xf32> to vector<16xf32>
    %43 = vector.shape_cast %42 : vector<16xf32> to vector<1x16xf32>
    %44 = arith.addf %38, %43 : vector<1x16xf32>
    %45 = arith.index_cast %arg1 : i32 to index
    %c0_23 = arith.constant 0 : index
    %c0_24 = arith.constant 0 : index
    %46 = vector.load %arg8[%45, %c0_23, %c0_24] : memref<4x1x16xf32, #tpu.memory_space<vmem>>, vector<1x1x16xf32>
    %47 = vector.shape_cast %46 : vector<1x1x16xf32> to vector<1x16xf32>
    %48 = vector.shape_cast %44 : vector<1x16xf32> to vector<1x1x16xf32>
    tpu.vector_store %arg8[%45, %c0_23, %c0_24], %48 {strides = array<i32>} : memref<4x1x16xf32, #tpu.memory_space<vmem>>, vector<1x1x16xf32>,
    %49 = arith.index_cast %arg1 : i32 to index
    %c0_25 = arith.constant 0 : index
    %c0_26 = arith.constant 0 : index
    %50 = vector.load %arg7[%49, %c0_25, %c0_26] : memref<4x1x16xf32, #tpu.memory_space<vmem>>, vector<1x1x16xf32>
    %51 = vector.shape_cast %50 : vector<1x1x16xf32> to vector<1x16xf32>
    %52 = vector.shape_cast %32 : vector<1x16xf32> to vector<1x1x16xf32>
    tpu.vector_store %arg7[%49, %c0_25, %c0_26], %52 {strides = array<i32>} : memref<4x1x16xf32, #tpu.memory_space<vmem>>, vector<1x1x16xf32>,
    %53 = arith.cmpi eq, %arg0, %arg1 : i32
    %54 = arith.extui %53 : i1 to i32
    %c0_i32_27 = arith.constant 0 : i32
    %55 = arith.cmpi ne, %54, %c0_i32_27 : i32
    scf.if %55 {
      %64 = tpu.iota {dimensions = array<i32: 0>} : vector<16x16xi32>
      %65 = tpu.iota {dimensions = array<i32: 1>} : vector<16x16xi32>
      %66 = arith.cmpi eq, %64, %65 : vector<16x16xi32>
      %cst_32 = arith.constant 0.000000e+00 : f32
      %67 = vector.broadcast %cst_32 : f32 to vector<16x16xf32>
      %68 = arith.select %66, %2, %67 : vector<16x16xi1>, vector<16x16xf32>
      %69 = vector.shape_cast %68 : vector<16x16xf32> to vector<1x16x16xf32>
      %cst_33 = arith.constant dense<0.000000e+00> : vector<1xf32>
      %70 = vector.multi_reduction <add>, %69, %cst_33 [1, 2] : vector<1x16x16xf32> to vector<1xf32>
      %71 = vector.shape_cast %70 : vector<1xf32> to vector<1x1x1xf32>
      %72 = vector.extract %71[0, 0, 0] : f32 from vector<1x1x1xf32>
      %c0_34 = arith.constant 0 : index
      %c0_35 = arith.constant 0 : index
      %73 = vector.load %arg9[%c0_34, %c0_35] : memref<1x1xf32, #tpu.memory_space<vmem>>, vector<1x1xf32>
      %cst_36 = arith.constant 2.000000e+00 : f32
      %74 = arith.mulf %cst_36, %72 : f32
      %75 = vector.broadcast %74 : f32 to vector<1x1xf32>
      %76 = arith.subf %73, %75 : vector<1x1xf32>
      %c0_37 = arith.constant 0 : index
      %c0_38 = arith.constant 0 : index
      %77 = vector.load %arg9[%c0_37, %c0_38] : memref<1x1xf32, #tpu.memory_space<vmem>>, vector<1x1xf32>
      tpu.vector_store %arg9[%c0_37, %c0_38], %76 {strides = array<i32>} : memref<1x1xf32, #tpu.memory_space<vmem>>, vector<1x1xf32>,
    } else {
    }
    %c3_i32 = arith.constant 3 : i32
    %56 = arith.cmpi eq, %arg1, %c3_i32 : i32
    %57 = arith.extui %56 : i1 to i32
    %c0_i32_28 = arith.constant 0 : i32
    %58 = arith.cmpi ne, %57, %c0_i32_28 : i32
    scf.if %58 {
      %c0_32 = arith.constant 0 : index
      %c0_33 = arith.constant 0 : index
      %64 = vector.load %arg5[%c0_32, %c0_33] : memref<16x1xf32, #tpu.memory_space<vmem>>, vector<16x1xf32>
      %c0_34 = arith.constant 0 : index
      %c0_35 = arith.constant 0 : index
      %65 = vector.load %arg6[%c0_34, %c0_35] : memref<16x1xf32, #tpu.memory_space<vmem>>, vector<16x1xf32>
      %66 = math.log %65 : vector<16x1xf32>
      %67 = arith.addf %64, %66 : vector<16x1xf32>
      %c0_36 = arith.constant 0 : index
      %c0_37 = arith.constant 0 : index
      %68 = vector.load %arg9[%c0_36, %c0_37] : memref<1x1xf32, #tpu.memory_space<vmem>>, vector<1x1xf32>
      %69 = vector.shape_cast %67 : vector<16x1xf32> to vector<1x16x1xf32>
      %cst_38 = arith.constant dense<0.000000e+00> : vector<1xf32>
      %70 = vector.multi_reduction <add>, %69, %cst_38 [1, 2] : vector<1x16x1xf32> to vector<1xf32>
      %71 = vector.shape_cast %70 : vector<1xf32> to vector<1x1x1xf32>
      %72 = vector.extract %71[0, 0, 0] : f32 from vector<1x1x1xf32>
      %73 = vector.broadcast %72 : f32 to vector<1x1xf32>
      %74 = arith.addf %68, %73 : vector<1x1xf32>
      %c0_39 = arith.constant 0 : index
      %c0_40 = arith.constant 0 : index
      %75 = vector.load %arg9[%c0_39, %c0_40] : memref<1x1xf32, #tpu.memory_space<vmem>>, vector<1x1xf32>
      tpu.vector_store %arg9[%c0_39, %c0_40], %74 {strides = array<i32>} : memref<1x1xf32, #tpu.memory_space<vmem>>, vector<1x1xf32>,
    } else {
    }
    %c3_i32_29 = arith.constant 3 : i32
    %59 = arith.cmpi eq, %arg0, %c3_i32_29 : i32
    %c3_i32_30 = arith.constant 3 : i32
    %60 = arith.cmpi eq, %arg1, %c3_i32_30 : i32
    %61 = arith.andi %59, %60 : i1
    %62 = arith.extui %61 : i1 to i32
    %c0_i32_31 = arith.constant 0 : i32
    %63 = arith.cmpi ne, %62, %c0_i32_31 : i32
    scf.if %63 {
      %c0_32 = arith.constant 0 : index
      %c0_33 = arith.constant 0 : index
      %c0_34 = arith.constant 0 : index
      %64 = vector.load %arg7[%c0_32, %c0_33, %c0_34] : memref<4x1x16xf32, #tpu.memory_space<vmem>>, vector<4x1x16xf32>
      %c0_35 = arith.constant 0 : index
      %c0_36 = arith.constant 0 : index
      %c0_37 = arith.constant 0 : index
      %65 = vector.load %arg8[%c0_35, %c0_36, %c0_37] : memref<4x1x16xf32, #tpu.memory_space<vmem>>, vector<4x1x16xf32>
      %66 = math.log %65 : vector<4x1x16xf32>
      %67 = arith.addf %64, %66 : vector<4x1x16xf32>
      %c0_38 = arith.constant 0 : index
      %c0_39 = arith.constant 0 : index
      %68 = vector.load %arg9[%c0_38, %c0_39] : memref<1x1xf32, #tpu.memory_space<vmem>>, vector<1x1xf32>
      %69 = vector.shape_cast %67 : vector<4x1x16xf32> to vector<1x4x1x16xf32>
      %cst_40 = arith.constant dense<0.000000e+00> : vector<1xf32>
      %70 = vector.multi_reduction <add>, %69, %cst_40 [1, 2, 3] : vector<1x4x1x16xf32> to vector<1xf32>
      %71 = vector.shape_cast %70 : vector<1xf32> to vector<1x1x1x1xf32>
      %72 = vector.extract %71[0, 0, 0, 0] : f32 from vector<1x1x1x1xf32>
      %73 = vector.broadcast %72 : f32 to vector<1x1xf32>
      %74 = arith.addf %68, %73 : vector<1x1xf32>
      %cst_41 = arith.constant 7.812500e-03 : f32
      %75 = vector.broadcast %cst_41 : f32 to vector<1x1xf32>
      %76 = arith.mulf %74, %75 : vector<1x1xf32>
      %c0_42 = arith.constant 0 : index
      %c0_43 = arith.constant 0 : index
      %77 = vector.load %arg4[%c0_42, %c0_43] : memref<1x1xf32, #tpu.memory_space<vmem>>, vector<1x1xf32>
      tpu.vector_store %arg4[%c0_42, %c0_43], %76 {strides = array<i32>} : memref<1x1xf32, #tpu.memory_space<vmem>>, vector<1x1xf32>,
    } else {
    }
    return
  }
  func.func @transform_0(%arg0: i32, %arg1: i32) -> (i32, i32) {
    %c0_i32 = arith.constant 0 : i32
    %c0_i32_0 = arith.constant 0 : i32
    return %arg0, %c0_i32 : i32, i32
  }
  func.func @transform_1(%arg0: i32, %arg1: i32) -> (i32, i32) {
    %c0_i32 = arith.constant 0 : i32
    %c0_i32_0 = arith.constant 0 : i32
    return %arg1, %c0_i32 : i32, i32
  }
  func.func @transform_2(%arg0: i32, %arg1: i32) -> (i32, i32) {
    %c0_i32 = arith.constant 0 : i32
    %c0_i32_0 = arith.constant 0 : i32
    %c0_i32_1 = arith.constant 0 : i32
    return %c0_i32, %c0_i32_0 : i32, i32
  }
}

</mosaic_0001>

<llo_original>
// kernel: tpu_custom_call.1
$region0: #{tpu_custom_call.1}
  #allocation0 [shape = 'u32[]', space=smem, size = 0x4, offset = 0x4, fixed_abs, tag = 'smem constant byte address 0x4 - core index']
  #allocation1 [shape = 'u32[144,128]{1,0:T(1,128)}', space=vmem, size = 0x12000, scoped, tag = 'internal scratch']
  #allocation2 [shape = 'f32[16,1]{1,0:T(8,128)}', space=vmem, size = 0x2000, scoped, tag = 'scratch operand']
  #allocation3 [shape = 'f32[16,1]{1,0:T(8,128)}', space=vmem, size = 0x2000, scoped, tag = 'scratch operand']
  #allocation4 [shape = 'f32[4,1,16]{2,1,0:T(1,128)}', space=vmem, size = 0x800, scoped, tag = 'scratch operand']
  #allocation5 [shape = 'f32[4,1,16]{2,1,0:T(1,128)}', space=vmem, size = 0x800, scoped, tag = 'scratch operand']
  #allocation6 [shape = 'f32[1,1]{1,0:T(1,128)}', space=vmem, size = 0x200, scoped, tag = 'scratch operand']
  %s0 = inlined_call_operand.vmem [shape: f32[64,32], index: 0, kind: input, shape index: {}]
  %s1 = inlined_call_operand.vmem [shape: f32[64,32], index: 1, kind: input, shape index: {}]
  %s2 = inlined_call_operand.hbm [shape: f32[1,1], index: 2, kind: output, shape index: {}]
  %s3 = sld [smem:[#allocation0]]
  $region61: #{tpu_custom_call.1} parent=0
    _
  %s5 = ssub.s32 1, %s3
  %s6 = scalar_select 0, %s5, %s3
  $region1: #{tpu_custom_call.1} parent=0
    #allocation7 [shape = 'u8[512]{0}', space=vmem, size = 0x400, scoped, tag = 'output window, operand 0, single buffered']
    #allocation8 [shape = 's32[2]{0}', space=sflag, size = 0x8, scoped, tag = 'scoped memory for tpu_custom_call.1']
    %7 = vsyncpa [#allocation8], 0
    loop: start=0, step=1, limit=18
    $region2: #{tpu_custom_call.1} parent=1 // loop_pre_header
      _
    $region3: #{tpu_custom_call.1} parent=1 // loop_header
      %s9 = sphi 0, %s13
      %p10 = scmp.ge.s32.totalorder %s9, 18
      %s16 = sphi 0, %s28
      %s17 = sphi 0, %s24
      %s18 = sphi 0, %s16
      %s19 = sphi 0, %s17
      %s20 = sphi 0, %s18
      %s21 = sphi 0, %s19
      %s31 = sphi 0, %s33
      %s34 = sphi 0, %s31
      %s35 = sphi 0, %s34
      %s51 = sphi 0, %s35
      %s57 = sphi 0, %s59
      %s60 = sphi 0, %s57
      %s61 = sphi 0, %s60
      %s77 = sphi 0, %s61
      %s81 = sphi 0, %s81
      %s83 = sphi 0, %s81
      %s84 = sphi 0, %s83
      %s98 = sphi 0, %s84
    $region4: #{tpu_custom_call.1} parent=1 // loop_header_branch
      %12 = sbr.rel (%p10) target = $region8
    $region5: #{tpu_custom_call.1} parent=1 // loop_body
      %s14 = ssub.s32 %s9, 1
      %s15 = ssub.s32 %s9, 2
      %s22 = sadd.s32 1, %s17
      %p23 = scmp.ge.s32.totalorder %s22, 4
      %s24 = scalar_select %p23, 0, %s22
      %s25 = sadd.s32 1, %s16
      %s26 = scalar_select %p23, %s25, %s16
      %p27 = scmp.ge.s32.totalorder %s26, 4
      %s28 = scalar_select %p27, 0, %s26
      %s29 = ssub.s32 %s16, %s28
      %p30 = scmp.eq.s32.totalorder %s29, 0
      %s32 = sadd.s32 %s31, 1
      %s33 = scalar_select %p30, %s31, %s32
      %p36 = pneg %p30
      %p37 = scmp.eq.s32.totalorder %s9, 15
      %p38 = por %p36, %p37
      %p39 = scmp.ne.s32.totalorder %s31, %s34
      %p40 = scmp.eq.s32.totalorder %s9, 0
      %p41 = por %p39, %p40
      %p42 = scmp.ne.s32.totalorder %s31, %s34
      %p43 = scmp.eq.s32.totalorder %s14, 15
      %p44 = por %p42, %p43
      %p45 = scmp.ne.s32.totalorder %s34, %s35
      %p46 = scmp.eq.s32.totalorder %s14, 0
      %p47 = por %p45, %p46
      %p48 = scmp.ne.s32.totalorder %s34, %s35
      %p49 = scmp.eq.s32.totalorder %s15, 15
      %p50 = por %p48, %p49
      %p52 = scmp.ne.s32.totalorder %s35, %s51
      %p53 = scmp.eq.s32.totalorder %s15, 0
      %p54 = por %p52, %p53
      %s55 = ssub.s32 %s17, %s24
      %p56 = scmp.eq.s32.totalorder %s55, 0
      %s58 = sadd.s32 %s57, 1
      %s59 = scalar_select %p56, %s57, %s58
      %p62 = pneg %p56
      %p63 = scmp.eq.s32.totalorder %s9, 15
      %p64 = por %p62, %p63
      %p65 = scmp.ne.s32.totalorder %s57, %s60
      %p66 = scmp.eq.s32.totalorder %s9, 0
      %p67 = por %p65, %p66
      %p68 = scmp.ne.s32.totalorder %s57, %s60
      %p69 = scmp.eq.s32.totalorder %s14, 15
      %p70 = por %p68, %p69
      %p71 = scmp.ne.s32.totalorder %s60, %s61
      %p72 = scmp.eq.s32.totalorder %s14, 0
      %p73 = por %p71, %p72
      %p74 = scmp.ne.s32.totalorder %s60, %s61
      %p75 = scmp.eq.s32.totalorder %s15, 15
      %p76 = por %p74, %p75
      %p78 = scmp.ne.s32.totalorder %s61, %s77
      %p79 = scmp.eq.s32.totalorder %s15, 0
      %p80 = por %p78, %p79
      %s82 = sadd.s32 %s81, 1
      %p85 = scmp.eq.s32.totalorder %s9, 15
      %p86 = scmp.ne.s32.totalorder %s81, %s83
      %p87 = scmp.eq.s32.totalorder %s9, 0
      %p88 = por %p86, %p87
      %p89 = scmp.ne.s32.totalorder %s81, %s83
      %p90 = scmp.eq.s32.totalorder %s14, 15
      %p91 = por %p89, %p90
      %p92 = scmp.ne.s32.totalorder %s83, %s84
      %p93 = scmp.eq.s32.totalorder %s14, 0
      %p94 = por %p92, %p93
      %p95 = scmp.ne.s32.totalorder %s83, %s84
      %p96 = scmp.eq.s32.totalorder %s15, 15
      %p97 = por %p95, %p96
      %p99 = scmp.ne.s32.totalorder %s84, %s98
      %p100 = scmp.eq.s32.totalorder %s15, 0
      %p101 = por %p99, %p100
      %p102 = scmp.le.s32.totalorder 1, %s9
      %p103 = scmp.lt.s32.totalorder %s9, 17
      %p104 = pnand %p102, %p103
      %p105 = pneg %p104
      // Predicated region
      $region9: #{tpu_custom_call.1} parent=5 // pred_check
        _
      $region10: #{tpu_custom_call.1} parent=5 // pred_check_branch
        %107 = sbr.rel (%p104) target = $region12
      $region11: #{tpu_custom_call.1} parent=5 // pred_region
        %s108 = ssub.s32 %s9, 1
      $region12: #{tpu_custom_call.1} parent=5 // pred_fallthru
        _
      %p109 = scmp.lt.s32.totalorder %s9, 16
      // Predicated region
      $region13: #{tpu_custom_call.1} parent=5 // pred_check
        %p110 = pneg %p109
      $region14: #{tpu_custom_call.1} parent=5 // pred_check_branch
        %112 = sbr.rel (%p110) target = $region16
      $region15: #{tpu_custom_call.1} parent=5 // pred_region
        // Predicated region
        $region17: #{tpu_custom_call.1} parent=15 // pred_check
          %p113 = pneg %p41
        $region18: #{tpu_custom_call.1} parent=15 // pred_check_branch
          %115 = sbr.rel (%p113) target = $region20
        $region19: #{tpu_custom_call.1} parent=15 // pred_region
          %s116 = smul.u32 2, %s16
          %p117 = scmp.lt.s32.totalorder %s116, 7
          %s118 = scalar_select %p117, %s116, 7
          %s119 = smul.addr %s118, 8
          %s120 = scalar_lea.vmem %s0, %s119
          %s121 = smul.u32 2, %s16
        $region20: #{tpu_custom_call.1} parent=15 // pred_fallthru
          _
        // Predicated region
        $region21: #{tpu_custom_call.1} parent=15 // pred_check
          %p122 = pneg %p67
        $region22: #{tpu_custom_call.1} parent=15 // pred_check_branch
          %124 = sbr.rel (%p122) target = $region24
        $region23: #{tpu_custom_call.1} parent=15 // pred_region
          %s125 = smul.u32 2, %s17
          %p126 = scmp.lt.s32.totalorder %s125, 7
          %s127 = scalar_select %p126, %s125, 7
          %s128 = smul.addr %s127, 8
          %s129 = scalar_lea.vmem %s1, %s128
          %s130 = smul.u32 2, %s17
        $region24: #{tpu_custom_call.1} parent=15 // pred_fallthru
          _
      $region16: #{tpu_custom_call.1} parent=5 // pred_fallthru
        _
      %p131 = scmp.le.s32.totalorder 1, %s9
      %p132 = scmp.lt.s32.totalorder %s9, 17
      %p133 = pnand %p131, %p132
      %p134 = pneg %p133
      // Predicated region
      $region25: #{tpu_custom_call.1} parent=5 // pred_check
        _
      $region26: #{tpu_custom_call.1} parent=5 // pred_check_branch
        %136 = sbr.rel (%p133) target = $region28
      $region27: #{tpu_custom_call.1} parent=5 // pred_region
        %s137 = ssub.s32 %s9, 1
        %s138 = smul.u32 2, %s18
        %p139 = scmp.lt.s32.totalorder %s138, 7
        %s140 = scalar_select %p139, %s138, 7
        %s141 = smul.addr %s140, 8
        %s142 = scalar_lea.vmem %s0, %s141
        %p143 = pneg %p47
        %p144 = pneg %p44
        %s145 = smul.u32 2, %s19
        %p146 = scmp.lt.s32.totalorder %s145, 7
        %s147 = scalar_select %p146, %s145, 7
        %s148 = smul.addr %s147, 8
        %s149 = scalar_lea.vmem %s1, %s148
        %p150 = pneg %p73
        %p151 = pneg %p70
        %p152 = pneg %p94
        %p153 = pneg %p91
        %s154 = smul.u32 2, %s18
        %p155 = scmp.lt.s32.totalorder %s154, 7
        %s156 = scalar_select %p155, %s154, 7
        %s157 = smul.addr %s156, 8
        %s158 = scalar_lea.vmem %s0, %s157
        %s159 = smul.u32 2, %s18
        %s160 = smul.u32 2, %s19
        %p161 = scmp.lt.s32.totalorder %s160, 7
        %s162 = scalar_select %p161, %s160, 7
        %s163 = smul.addr %s162, 8
        %s164 = scalar_lea.vmem %s1, %s163
        %s165 = smul.u32 2, %s19
        %v166 = vld [vmem:[%s158] sm:$0xff]
        %v167 = vld [vmem:[%s158 + $0x8] sm:$0xff]
        %v168 = vld [vmem:[%s164] sm:$0xff]
        %v169 = vld [vmem:[%s164 + $0x8] sm:$0xff]
        %vm170 = vcmask 261120
        %v172 = vsel %vm170, %v166, 0
        %v175 = vsel %vm170, %v167, 0
        %v178 = vsel %vm170, %v168, 0
        %v181 = vsel %vm170, %v169, 0
        %183 = vmatprep.subr.mxu0 0.0
        %184 = vmatpush1.xpose.msra.mxu0 %v178
        %185 = vmatprep.subr.mxu0 0.0
        %186 = vmatpush1.xpose.msra.mxu0 %v181
        %187 = vmatprep.subr.mxu0 0.0
        %188 = vmatpush1.xpose.msra.mxu0 0.0
        %189 = vmatprep.subr.mxu0 0.0
        %190 = vmatpush1.xpose.msra.mxu0 0.0
        %191 = vmatprep.subr.mxu0 0.0
        %192 = vmatpush1.xpose.msra.mxu0 0.0
        %193 = vmatprep.subr.mxu0 0.0
        %194 = vmatpush1.xpose.msra.mxu0 0.0
        %195 = vmatprep.subr.mxu0 0.0
        %196 = vmatpush1.xpose.msra.mxu0 0.0
        %197 = vmatprep.subr.mxu0 0.0
        %198 = vmatpush1.xpose.msra.mxu0 0.0
        %199 = vmatprep.subr.mxu0 0.0
        %200 = vmatpush1.xpose.msra.mxu0 0.0
        %201 = vmatprep.subr.mxu0 0.0
        %202 = vmatpush1.xpose.msra.mxu0 0.0
        %203 = vmatprep.subr.mxu0 0.0
        %204 = vmatpush1.xpose.msra.mxu0 0.0
        %205 = vmatprep.subr.mxu0 0.0
        %206 = vmatpush1.xpose.msra.mxu0 0.0
        %207 = vmatprep.subr.mxu0 0.0
        %208 = vmatpush1.xpose.msra.mxu0 0.0
        %209 = vmatprep.subr.mxu0 0.0
        %210 = vmatpush1.xpose.msra.mxu0 0.0
        %211 = vmatprep.subr.mxu0 0.0
        %212 = vmatpush1.xpose.msra.mxu0 0.0
        %213 = vmatprep.subr.mxu0 0.0
        %214 = vmatpush1.xpose.msra.mxu0 0.0
        %215 = vmatprep.subr.mxu0 0.0
        %216 = vmatpush1.xpose.msra.mxu0 0.0
        %217 = vmatprep.subr.mxu0 0.0
        %218 = vmatpush1.xpose.msra.mxu0 0.0
        %219 = vmatprep.subr.mxu0 0.0
        %220 = vmatpush1.xpose.msra.mxu0 0.0
        %221 = vmatprep.subr.mxu0 0.0
        %222 = vmatpush1.xpose.msra.mxu0 0.0
        %223 = vmatprep.subr.mxu0 0.0
        %224 = vmatpush1.xpose.msra.mxu0 0.0
        %225 = vmatprep.subr.mxu0 0.0
        %226 = vmatpush1.xpose.msra.mxu0 0.0
        %227 = vmatprep.subr.mxu0 0.0
        %228 = vmatpush1.xpose.msra.mxu0 0.0
        %229 = vmatprep.subr.mxu0 0.0
        %230 = vmatpush1.xpose.msra.mxu0 0.0
        %231 = vmatprep.subr.mxu0 0.0
        %232 = vmatpush1.xpose.msra.mxu0 0.0
        %233 = vmatprep.subr.mxu0 0.0
        %234 = vmatpush1.xpose.msra.mxu0 0.0
        %235 = vmatprep.subr.mxu0 0.0
        %236 = vmatpush1.xpose.msra.mxu0 0.0
        %237 = vmatprep.subr.mxu0 0.0
        %238 = vmatpush1.xpose.msra.mxu0 0.0
        %239 = vmatprep.subr.mxu0 0.0
        %240 = vmatpush1.xpose.msra.mxu0 0.0
        %241 = vmatprep.subr.mxu0 0.0
        %242 = vmatpush1.xpose.msra.mxu0 0.0
        %243 = vmatprep.subr.mxu0 0.0
        %244 = vmatpush1.xpose.msra.mxu0 0.0
        %245 = vmatprep.subr.mxu0 0.0
        %246 = vmatpush1.xpose.msra.mxu0 0.0
        %247 = vmatprep.mubr.f32.mxu0 0.0
        %248 = vmatmul.mubr.f32.gmra.mrb[0].mxu0 %v172
        %v249 = vpop.f32.mrb[0].mxu0
        %v250 = vadd.f32 0.0, %v249
        %v251 = vpop.f32.mrb[0].mxu0
        %252 = vmatprep.mubr.f32.mxu0 0.0
        %253 = vmatmul.mubr.f32.gmra.mrb[0].mxu0 %v175
        %v254 = vpop.f32.mrb[0].mxu0
        %v255 = vadd.f32 0.0, %v254
        %v256 = vpop.f32.mrb[0].mxu0
        %257 = vdwg.mxu0
        %p258 = scmp.eq.s32.totalorder %s18, 0
        %p259 = scmp.eq.s32.totalorder %s19, 0
        %p260 = pnand %p258, %p259
        %p261 = pneg %p260
        // Predicated region
        $region29: #{tpu_custom_call.1} parent=27 // pred_check
          _
        $region30: #{tpu_custom_call.1} parent=27 // pred_check_branch
          %263 = sbr.rel (%p260) target = $region32
        $region31: #{tpu_custom_call.1} parent=27 // pred_region
          %vm264 = vcmask 0
          %265 = vst.msk [vmem:[#allocation6] sm:$0x1] %vm264, 0.0
          %vm266 = vcmask 122880
          %267 = vst.msk [vmem:[#allocation4] sm:$0x1] %vm266, -inf
          %268 = vst.msk [vmem:[#allocation4 + $0x1] sm:$0x1] %vm266, -inf
          %269 = vst.msk [vmem:[#allocation4 + $0x2] sm:$0x1] %vm266, -inf
          %270 = vst.msk [vmem:[#allocation4 + $0x3] sm:$0x1] %vm266, -inf
          %271 = vst.msk [vmem:[#allocation5] sm:$0x1] %vm266, 0.0
          %272 = vst.msk [vmem:[#allocation5 + $0x1] sm:$0x1] %vm266, 0.0
          %273 = vst.msk [vmem:[#allocation5 + $0x2] sm:$0x1] %vm266, 0.0
          %274 = vst.msk [vmem:[#allocation5 + $0x3] sm:$0x1] %vm266, 0.0
        $region32: #{tpu_custom_call.1} parent=27 // pred_fallthru
          _
        // Predicated region
        $region33: #{tpu_custom_call.1} parent=27 // pred_check
          %p275 = pneg %p259
        $region34: #{tpu_custom_call.1} parent=27 // pred_check_branch
          %277 = sbr.rel (%p275) target = $region36
        $region35: #{tpu_custom_call.1} parent=27 // pred_region
          %vm278 = vcmask 7168
          %279 = vst.msk [vmem:[#allocation2] sm:$0xff] %vm278, -inf
          %280 = vst.msk [vmem:[#allocation2 + $0x8] sm:$0xff] %vm278, -inf
          %281 = vst.msk [vmem:[#allocation3] sm:$0xff] %vm278, 0.0
          %282 = vst.msk [vmem:[#allocation3 + $0x8] sm:$0xff] %vm278, 0.0
        $region36: #{tpu_custom_call.1} parent=27 // pred_fallthru
          _
        %v283 = vld [vmem:[#allocation2] sm:$0xff]
        %v284 = vld [vmem:[#allocation2 + $0x8] sm:$0xff]
        %vm285 = vcmask 130048
        %v286 = vsel %vm285, %v250, -inf
        %287 = vmax.xlane.f32.xlu0 %v286
        %v288 = vpop.xlane.xlu0 %287
        %v289 = vsel %vm285, %v255, -inf
        %290 = vmax.xlane.f32.xlu0 %v289
        %v291 = vpop.xlane.xlu0 %290
        %v292 = vmax.f32 %v283, %v288
        %v293 = vmax.f32 %v284, %v291
        %v294 = vld [vmem:[#allocation3] sm:$0xff]
        %v295 = vld [vmem:[#allocation3 + $0x8] sm:$0xff]
        %v296 = vsub.f32 %v283, %v292
        %v297 = vsub.f32 %v284, %v293
        %v298 = vmul.f32 %v296, 1.442695
        %v299 = vpow.pop %v298
        %v300 = vmul.f32 %v297, 1.442695
        %v301 = vpow.pop %v300
        %v302 = vmul.f32 %v294, %v299
        %v303 = vmul.f32 %v295, %v301
        %305 = vset.pattern.permute.xlu0 0
        %306 = vperm.xlu0 %305, %v292
        %v307 = vpop.permute.xlu0 %306
        %310 = vset.pattern.permute.xlu0 0
        %311 = vperm.xlu0 %310, %v293
        %v312 = vpop.permute.xlu0 %311
        %v314 = vsub.f32 %v250, %v307
        %v315 = vsub.f32 %v255, %v312
        %v316 = vmul.f32 %v314, 1.442695
        %v317 = vpow.pop %v316
        %v318 = vmul.f32 %v315, 1.442695
        %v319 = vpow.pop %v318
        %v320 = vsel %vm285, %v317, 0.0
        %321 = vadd.xlane.f32.xlu0 %v320
        %v322 = vpop.xlane.xlu0 %321
        %v323 = vsel %vm285, %v319, 0.0
        %324 = vadd.xlane.f32.xlu0 %v323
        %v325 = vpop.xlane.xlu0 %324
        %v326 = vadd.f32 %v302, %v322
        %v327 = vadd.f32 %v303, %v325
        %vm328 = vcmask 7168
        %329 = vst.msk [vmem:[#allocation3] sm:$0xff] %vm328, %v326
        %330 = vst.msk [vmem:[#allocation3 + $0x8] sm:$0xff] %vm328, %v327
        %331 = vst.msk [vmem:[#allocation2] sm:$0xff] %vm328, %v292
        %332 = vst.msk [vmem:[#allocation2 + $0x8] sm:$0xff] %vm328, %v293
        %s333 = scalar_lea.vmem [#allocation4], %s19
        %v334 = vld [vmem:[%s333] sm:$0x1]
        %v335 = vmax.f32 %v286, %v289
        %v336 = vrot.slane %v335, 4
        %v337 = vmax.f32 %v335, %v336
        %v338 = vrot.slane %v337, 2
        %v339 = vmax.f32 %v337, %v338
        %v340 = vrot.slane %v339, 1
        %v341 = vmax.f32 %v339, %v340
        %v342 = vmax.f32 %v334, %v341
        %s343 = scalar_lea.vmem [#allocation5], %s19
        %v344 = vld [vmem:[%s343] sm:$0x1]
        %v345 = vsub.f32 %v334, %v342
        %v346 = vmul.f32 %v345, 1.442695
        %v347 = vpow.pop %v346
        %v348 = vmul.f32 %v344, %v347
        %v350 = vlaneseq
        %v351 = vshrl.u32 %v350, 7
        %v352 = vsub.s32 0, %v351
        %v353 = vrot.slane %v342, %v352
        %v355 = vsub.f32 %v250, %v353
        %v356 = vsub.f32 %v255, %v353
        %v357 = vmul.f32 %v355, 1.442695
        %v358 = vpow.pop %v357
        %v359 = vmul.f32 %v356, 1.442695
        %v360 = vpow.pop %v359
        %v361 = vsel %vm285, %v358, 0.0
        %v362 = vsel %vm285, %v360, 0.0
        %v363 = vadd.f32 %v361, %v362
        %v364 = vrot.slane %v363, 4
        %v365 = vadd.f32 %v363, %v364
        %v366 = vrot.slane %v365, 2
        %v367 = vadd.f32 %v365, %v366
        %v368 = vrot.slane %v367, 1
        %v369 = vadd.f32 %v367, %v368
        %v370 = vadd.f32 %v348, %v369
        %vm371 = vcmask 122880
        %372 = vst.msk [vmem:[%s343] sm:$0x1] %vm371, %v370
        %373 = vst.msk [vmem:[%s333] sm:$0x1] %vm371, %v342
        %p374 = scmp.eq.s32.totalorder %s18, %s19
        // Predicated region
        $region37: #{tpu_custom_call.1} parent=27 // pred_check
          %p375 = pneg %p374
        $region38: #{tpu_custom_call.1} parent=27 // pred_check_branch
          %377 = sbr.rel (%p375) target = $region40
        $region39: #{tpu_custom_call.1} parent=27 // pred_region
          %v378 = vlaneseq
          %v379 = vshrl.u32 %v378, 7
          %v380 = vadd.s32 %v379, 8
          %v381 = vlaneseq
          %v382 = vand.u32 %v381, 127
          %vm383 = vcmp.eq.s32.totalorder %v379, %v382
          %vm384 = vcmp.eq.s32.totalorder %v380, %v382
          %v385 = vsel %vm383, %v250, 0.0
          %v386 = vsel %vm384, %v255, 0.0
          %v387 = vsel %vm285, %v385, 0.0
          %v388 = vsel %vm285, %v386, 0.0
          %v389 = vadd.f32 %v387, %v388
          %390 = vadd.xlane.f32.xlu0 %v389
          %v391 = vpop.xlane.xlu0 %390
          %v392 = vrot.slane %v391, 4
          %v393 = vadd.f32 %v391, %v392
          %v394 = vrot.slane %v393, 2
          %v395 = vadd.f32 %v393, %v394
          %v396 = vrot.slane %v395, 1
          %v397 = vadd.f32 %v395, %v396
          %s398 = vtos %v397
          %v399 = vld [vmem:[#allocation6] sm:$0x1]
          %s400 = smul.f32 %s398, 2.0
          %v401 = vstv %s400
          %v402 = vsub.f32 %v399, %v401
          %vm403 = vcmask 0
          %404 = vst.msk [vmem:[#allocation6] sm:$0x1] %vm403, %v402
        $region40: #{tpu_custom_call.1} parent=27 // pred_fallthru
          _
        %p405 = scmp.eq.s32.totalorder %s19, 3
        // Predicated region
        $region41: #{tpu_custom_call.1} parent=27 // pred_check
          %p406 = pneg %p405
        $region42: #{tpu_custom_call.1} parent=27 // pred_check_branch
          %408 = sbr.rel (%p406) target = $region44
        $region43: #{tpu_custom_call.1} parent=27 // pred_region
          %v409 = vld [vmem:[#allocation2] sm:$0xff]
          %v410 = vld [vmem:[#allocation2 + $0x8] sm:$0xff]
          %v411 = vld [vmem:[#allocation3] sm:$0xff]
          %v412 = vld [vmem:[#allocation3 + $0x8] sm:$0xff]
          %v413 = vlog2.pop %v411
          %v414 = vmul.f32 %v413, 0.6931472
          %v415 = vlog2.pop %v412
          %v416 = vmul.f32 %v415, 0.6931472
          %v417 = vadd.f32 %v409, %v414
          %v418 = vadd.f32 %v410, %v416
          %v419 = vld [vmem:[#allocation6] sm:$0x1]
          %v420 = vsel %vm328, %v417, 0.0
          %v421 = vsel %vm328, %v418, 0.0
          %v422 = vadd.f32 %v420, %v421
          %423 = vadd.xlane.f32.xlu0 %v422
          %v424 = vpop.xlane.xlu0 %423
          %v425 = vrot.slane %v424, 4
          %v426 = vadd.f32 %v424, %v425
          %v427 = vrot.slane %v426, 2
          %v428 = vadd.f32 %v426, %v427
          %v429 = vrot.slane %v428, 1
          %v430 = vadd.f32 %v428, %v429
          %s431 = vtos %v430
          %v432 = vstv %s431
          %v433 = vadd.f32 %v419, %v432
          %vm434 = vcmask 0
          %435 = vst.msk [vmem:[#allocation6] sm:$0x1] %vm434, %v433
        $region44: #{tpu_custom_call.1} parent=27 // pred_fallthru
          _
        %p436 = scmp.eq.s32.totalorder %s18, 3
        %p437 = pnand %p436, %p405
        %p438 = pneg %p437
        // Predicated region
        $region45: #{tpu_custom_call.1} parent=27 // pred_check
          _
        $region46: #{tpu_custom_call.1} parent=27 // pred_check_branch
          %440 = sbr.rel (%p437) target = $region48
        $region47: #{tpu_custom_call.1} parent=27 // pred_region
          %v441 = vld [vmem:[#allocation4] sm:$0x1]
          %v442 = vld [vmem:[#allocation4 + $0x1] sm:$0x1]
          %v443 = vld [vmem:[#allocation4 + $0x2] sm:$0x1]
          %v444 = vld [vmem:[#allocation4 + $0x3] sm:$0x1]
          %v445 = vld [vmem:[#allocation5] sm:$0x1]
          %v446 = vld [vmem:[#allocation5 + $0x1] sm:$0x1]
          %v447 = vld [vmem:[#allocation5 + $0x2] sm:$0x1]
          %v448 = vld [vmem:[#allocation5 + $0x3] sm:$0x1]
          %v449 = vlog2.pop %v445
          %v450 = vmul.f32 %v449, 0.6931472
          %v451 = vlog2.pop %v446
          %v452 = vmul.f32 %v451, 0.6931472
          %v453 = vlog2.pop %v447
          %v454 = vmul.f32 %v453, 0.6931472
          %v455 = vlog2.pop %v448
          %v456 = vmul.f32 %v455, 0.6931472
          %v457 = vadd.f32 %v441, %v450
          %v458 = vadd.f32 %v442, %v452
          %v459 = vadd.f32 %v443, %v454
          %v460 = vadd.f32 %v444, %v456
          %v461 = vld [vmem:[#allocation6] sm:$0x1]
          %v462 = vsel %vm371, %v457, 0.0
          %v463 = vsel %vm371, %v458, 0.0
          %v464 = vadd.f32 %v462, %v463
          %v465 = vsel %vm371, %v459, 0.0
          %v466 = vadd.f32 %v464, %v465
          %v467 = vsel %vm371, %v460, 0.0
          %v468 = vadd.f32 %v466, %v467
          %469 = vadd.xlane.f32.xlu0 %v468
          %v470 = vpop.xlane.xlu0 %469
          %v471 = vrot.slane %v470, 4
          %v472 = vadd.f32 %v470, %v471
          %v473 = vrot.slane %v472, 2
          %v474 = vadd.f32 %v472, %v473
          %v475 = vrot.slane %v474, 1
          %v476 = vadd.f32 %v474, %v475
          %s477 = vtos %v476
          %v478 = vstv %s477
          %v479 = vadd.f32 %v461, %v478
          %v480 = vmul.f32 %v479, 0.0078125
          %vm481 = vcmask 0
          %482 = vst.msk [vmem:[#allocation7] sm:$0x1] %vm481, %v480
        $region48: #{tpu_custom_call.1} parent=27 // pred_fallthru
          _
        // Predicated region
        $region49: #{tpu_custom_call.1} parent=27 // pred_check
          %p483 = pneg %p91
        $region50: #{tpu_custom_call.1} parent=27 // pred_check_branch
          %485 = sbr.rel (%p483) target = $region52
        $region51: #{tpu_custom_call.1} parent=27 // pred_region
          %s487 = ssub.s32 16, 16
          %488 = vsyncadd [#allocation8], %s487
          %s490 = sshll.u32 [#allocation7], 4
          %s491 = int_to_ptr.vmem [resolvable:$true] %s490
          %493 = dma.vmem_to_hbm [thread:$0]  %s491, 16, %s2, [#allocation8]
        $region52: #{tpu_custom_call.1} parent=27 // pred_fallthru
          _
        // Predicated region
        $region53: #{tpu_custom_call.1} parent=27 // pred_check
          %p494 = pneg %p91
        $region54: #{tpu_custom_call.1} parent=27 // pred_check_branch
          %496 = sbr.rel (%p494) target = $region56
        $region55: #{tpu_custom_call.1} parent=27 // pred_region
          %497 = dma.done [#allocation8], 16
        $region56: #{tpu_custom_call.1} parent=27 // pred_fallthru
          _
      $region28: #{tpu_custom_call.1} parent=5 // pred_fallthru
        _
      %p498 = scmp.le.s32.totalorder 2, %s9
      // Predicated region
      $region57: #{tpu_custom_call.1} parent=5 // pred_check
        %p499 = pneg %p498
      $region58: #{tpu_custom_call.1} parent=5 // pred_check_branch
        %501 = sbr.rel (%p499) target = $region60
      $region59: #{tpu_custom_call.1} parent=5 // pred_region
        %s502 = ssub.s32 %s9, 2
      $region60: #{tpu_custom_call.1} parent=5 // pred_fallthru
        _
    $region6: #{tpu_custom_call.1} parent=1 // loop_footer
      %s13 = sadd.s32 1, %s9
    $region7: #{tpu_custom_call.1} parent=1 // loop_footer_branch
      %8 = sbr.rel target = $region3
    $region8: #{tpu_custom_call.1} parent=1 // loop_exit
      _
    %503 = vsyncpa [#allocation8], 1
    %s504 = scalar_lea.sflag [#allocation8], 1
    %505 = vsyncpa %s504, 1

</llo_original>
